<compile_context>
chip_gen: v5e
topology: v5e:2x2
jax: 0.10.0
libtpu: 0.0.40
codegen_flags: <defaults>
</compile_context>

<pallas_src>
import math

import jax
import jax.numpy as jnp
from jax import lax
from jax.experimental import pallas as pl
from jax.experimental.pallas import tpu as pltpu

d_k = d_v = 64  # matches the PyTorch module's globals


def _sdpa_kernel(q_ref, k_ref, v_ref, mask_ref, ctx_ref, attn_ref):
    # Blocks: q (G, TQ, d_k) bf16 (pre-scaled by 1/sqrt(d_k)) | k (G, Lk, d_k) bf16
    #         v (G, Lk, d_v) bf16 | mask (G, TQ, Lk) int8
    #         ctx (G, TQ, d_v) f32 | attn (G, TQ, Lk) f32
    q = q_ref[...]
    k = k_ref[...]
    v = v_ref[...]
    m = mask_ref[...]

    # scores[g, i, j] = sum_d q[g, i, d] * k[g, j, d]
    # Batched dot_general contracting the last dims -> no explicit K transpose;
    # bf16 MXU operands, f32 accumulation.
    scores = lax.dot_general(
        q, k,
        dimension_numbers=(((2,), (2,)), ((0,), (0,))),
        preferred_element_type=jnp.float32,
    )

    # masked_fill_(attn_mask, -1e9)
    scores = jnp.where(m != 0, jnp.float32(-1e9), scores)

    # Numerically stable softmax over keys, in f32.  Exact division so rows sum
    # to 1 to f32 precision (the kernel is HBM-bound; the divide is free).
    scores = scores - jnp.max(scores, axis=-1, keepdims=True)
    e = jnp.exp(scores)
    attn = e / jnp.sum(e, axis=-1, keepdims=True)
    attn_ref[...] = attn.astype(attn_ref.dtype)

    # context = attn @ V : bf16 MXU operands, f32 accumulation.
    ctx = lax.dot_general(
        attn.astype(jnp.bfloat16), v,
        dimension_numbers=(((2,), (1,)), ((0,), (0,))),
        preferred_element_type=jnp.float32,
    )
    ctx_ref[...] = ctx.astype(ctx_ref.dtype)


def _lane_pad(n):
    return ((n + 127) // 128) * 128


def _block_bytes(G, TQ, Lk, Dk, Dv):
    """Approximate per-grid-step VMEM working set: double-buffered I/O blocks
    (with last-dim padding to 128 lanes) + ~3x attn-block f32 temporaries."""
    dkp, dvp, lkp = _lane_pad(Dk), _lane_pad(Dv), _lane_pad(Lk)
    q = 2 * G * TQ * dkp * 2       # bf16, 2 pipeline buffers
    k = 2 * G * Lk * dkp * 2       # bf16
    v = 2 * G * Lk * dvp * 2       # bf16
    msk = 2 * G * TQ * lkp * 1     # int8
    ctx = 2 * G * TQ * dvp * 4     # f32
    att = 2 * G * TQ * lkp * 4     # f32
    tmp = 3 * G * TQ * lkp * 4     # f32 scores / exp / attn live values
    return q + k + v + msk + ctx + att + tmp


def _vmem_capacity_bytes():
    try:
        return int(pltpu.get_tpu_info().vmem_capacity_bytes)
    except Exception:
        # Conservative fallback (v7x per-TC size) -- safe on every generation.
        return 64 * 1024 * 1024


def _choose_tiles(BH, Lq, Lk, Dk, Dv, budget):
    # Head-group size: fill sublanes / amortize the ~0.35us per-step overhead, but
    # keep >= 2 steps on the head grid axis where possible so v7x's two TensorCores
    # both get work without duplicating K/V DMA.
    g_all = [g for g in range(min(8, BH), 0, -1) if BH % g == 0]
    g_cands = [g for g in g_all if BH // g >= 2] or g_all

    # Query tile: multiples of 16 (bf16 sublane packing) that divide Lq, plus the
    # always-legal full-Lq fallback.  Prefer the largest tile that fits the budget.
    tq_cands = sorted(
        {t for t in range(16, min(512, Lq) + 1, 16) if Lq % t == 0} | {Lq},
        reverse=True,
    )

    for tq in tq_cands:
        for g in g_cands:
            if _block_bytes(g, tq, Lk, Dk, Dv) <= budget:
                return g, tq
    # Last resort: smallest tiles (vmem_limit below is raised to match the need).
    return 1, tq_cands[-1]


def scaled_dot_product_attention(Q, K, V, attn_mask):
    """
    Q: [B, H, len_q, d_k]   K: [B, H, len_k, d_k]   V: [B, H, len_k, d_v]
    attn_mask: [B, H, len_q, len_k] (bool/int; nonzero == masked out)
    Returns (context [B, H, len_q, d_v], attn [B, H, len_q, len_k]) in float32.
    """
    B, H, Lq, Dk = Q.shape
    Lk = K.shape[2]
    Dv = V.shape[3]
    BH = B * H
    scale = 1.0 / math.sqrt(d_k)  # exact power of two (d_k = 64)

    def as_bf16(x):
        return x if x.dtype == jnp.bfloat16 else x.astype(jnp.bfloat16)

    # bf16 MXU operands (halves HBM read traffic vs f32); the scale is folded into
    # Q here, fusing with the cast -- no extra HBM pass, no in-kernel prologue.
    qf = as_bf16(Q.reshape(BH, Lq, Dk) * jnp.asarray(scale, Q.dtype))
    kf = as_bf16(K.reshape(BH, Lk, Dk))
    vf = as_bf16(V.reshape(BH, Lk, Dv))

    # Mask: stream as 1-byte elements.  int8/uint8 pass through untouched; other
    # dtypes (incl. bool) are converted once (Mosaic i1 memrefs are not relied on).
    mf = attn_mask.reshape(BH, Lq, Lk)
    if mf.dtype.name not in ("int8", "uint8"):
        mf = (mf != 0).astype(jnp.int8)

    vmem_cap = _vmem_capacity_bytes()
    budget = (vmem_cap * 3) // 5  # ~60% of capacity: headroom for compiler scratch
    G, TQ = _choose_tiles(BH, Lq, Lk, Dk, Dv, budget)
    need = _block_bytes(G, TQ, Lk, Dk, Dv)
    vmem_limit = int(min((vmem_cap * 9) // 10,
                         max(2 * need, 32 * 1024 * 1024)))

    grid = (BH // G, Lq // TQ)
    # Bias the megacore split toward the head axis (each core keeps its own K/V
    # reuse); if there is only one head-group step, let the q axis split instead.
    dim_sem = ("parallel", "arbitrary") if grid[0] >= 2 else ("arbitrary", "parallel")

    ctx, attn = pl.pallas_call(
        _sdpa_kernel,
        out_shape=(
            jax.ShapeDtypeStruct((BH, Lq, Dv), jnp.float32),
            jax.ShapeDtypeStruct((BH, Lq, Lk), jnp.float32),
        ),
        grid_spec=pltpu.PrefetchScalarGridSpec(
            num_scalar_prefetch=0,
            grid=grid,
            in_specs=[
                pl.BlockSpec((G, TQ, Dk), lambda h, q: (h, q, 0)),
                pl.BlockSpec((G, Lk, Dk), lambda h, q: (h, 0, 0)),  # reused across q tiles
                pl.BlockSpec((G, Lk, Dv), lambda h, q: (h, 0, 0)),  # reused across q tiles
                pl.BlockSpec((G, TQ, Lk), lambda h, q: (h, q, 0)),
            ],
            out_specs=[
                pl.BlockSpec((G, TQ, Dv), lambda h, q: (h, q, 0)),
                pl.BlockSpec((G, TQ, Lk), lambda h, q: (h, q, 0)),
            ],
        ),
        compiler_params=pltpu.CompilerParams(
            dimension_semantics=dim_sem,
            vmem_limit_bytes=vmem_limit,
        ),
    )(qf, kf, vf, mf)

    return ctx.reshape(B, H, Lq, Dv), attn.reshape(B, H, Lq, Lk)


def _reference(Q, K, V, attn_mask):
    """Pure-f32 JAX reference matching the PyTorch module."""
    scores = jnp.einsum("bhqd,bhkd->bhqk", Q, K) / jnp.sqrt(jnp.float32(d_k))
    scores = jnp.where(attn_mask, jnp.float32(-1e9), scores)
    attn = jax.nn.softmax(scores, axis=-1)
    context = jnp.einsum("bhqk,bhkv->bhqv", attn, V)
    return context, attn


if __name__ == "__main__":
    B, H, Lq, Lk = 2, 2, 8, 8

    key = jax.random.PRNGKey(0)
    kq, kk, kv, km = jax.random.split(key, 4)
    Q = jax.random.normal(kq, (B, H, Lq, d_k), dtype=jnp.float32)
    K = jax.random.normal(kk, (B, H, Lk, d_k), dtype=jnp.float32)
    V = jax.random.normal(kv, (B, H, Lk, d_v), dtype=jnp.float32)
    # True == masked out; keep at least one unmasked key per query.
    attn_mask = jax.random.bernoulli(km, p=0.3, shape=(B, H, Lq, Lk))
    attn_mask = attn_mask.at[..., 0].set(False)

    ctx, attn = scaled_dot_product_attention(Q, K, V, attn_mask)
    jax.block_until_ready((ctx, attn))

    ctx_ref, attn_ref = _reference(Q, K, V, attn_mask)
    # Tolerances reflect the intentional bf16 MXU operands (f32 accumulation/softmax).
    assert jnp.allclose(attn, attn_ref, atol=4e-2, rtol=4e-2), "attn mismatch"
    assert jnp.allclose(ctx, ctx_ref, atol=8e-2, rtol=4e-2), "context mismatch"
    # Softmax rows must sum to 1 (exact division in the kernel).
    assert jnp.allclose(attn.sum(-1), 1.0, atol=1e-3), "attn rows not normalized"

    print("KERNEL_OK")
</pallas_src>

<mosaic_0001>
module attributes {stable_mosaic.version = 11 : i64} {
  func.func @_sdpa_kernel(%arg0: i32, %arg1: i32, %arg2: memref<2x8x64xbf16, #tpu.memory_space<vmem>>, %arg3: memref<2x8x64xbf16, #tpu.memory_space<vmem>>, %arg4: memref<2x8x64xbf16, #tpu.memory_space<vmem>>, %arg5: memref<2x8x8xi8, #tpu.memory_space<vmem>>, %arg6: memref<2x8x64xf32, #tpu.memory_space<vmem>>, %arg7: memref<2x8x8xf32, #tpu.memory_space<vmem>>) attributes {dimension_semantics = [#tpu.dimension_semantics<parallel>, #tpu.dimension_semantics<arbitrary>], iteration_bounds = array<i64: 2, 1>, scalar_prefetch = 0 : i64, scratch_operands = 0 : i64, tpu.core_type = #tpu.core_type<tc>, window_params = [{transform_indices = @transform_0, window_bounds = array<i64: 2, 8, 64>}, {transform_indices = @transform_1, window_bounds = array<i64: 2, 8, 64>}, {transform_indices = @transform_2, window_bounds = array<i64: 2, 8, 64>}, {transform_indices = @transform_3, window_bounds = array<i64: 2, 8, 8>}, {transform_indices = @transform_4, window_bounds = array<i64: 2, 8, 64>}, {transform_indices = @transform_5, window_bounds = array<i64: 2, 8, 8>}]} {
    %c0 = arith.constant 0 : index
    %c0_0 = arith.constant 0 : index
    %c0_1 = arith.constant 0 : index
    %0 = vector.load %arg2[%c0, %c0_0, %c0_1] : memref<2x8x64xbf16, #tpu.memory_space<vmem>>, vector<2x8x64xbf16>
    %c0_2 = arith.constant 0 : index
    %c0_3 = arith.constant 0 : index
    %c0_4 = arith.constant 0 : index
    %1 = vector.load %arg3[%c0_2, %c0_3, %c0_4] : memref<2x8x64xbf16, #tpu.memory_space<vmem>>, vector<2x8x64xbf16>
    %c0_5 = arith.constant 0 : index
    %c0_6 = arith.constant 0 : index
    %c0_7 = arith.constant 0 : index
    %2 = vector.load %arg4[%c0_5, %c0_6, %c0_7] : memref<2x8x64xbf16, #tpu.memory_space<vmem>>, vector<2x8x64xbf16>
    %c0_8 = arith.constant 0 : index
    %c0_9 = arith.constant 0 : index
    %c0_10 = arith.constant 0 : index
    %3 = vector.load %arg5[%c0_8, %c0_9, %c0_10] : memref<2x8x8xi8, #tpu.memory_space<vmem>>, vector<2x8x8xi8>
    %cst = arith.constant dense<0.000000e+00> : vector<2x8x8xf32>
    %4 = tpu.matmul %0, %1, %cst {dimension_numbers = #tpu.dot_dimension_numbers<[2], [2], [1], [1], [0, 0, 0, 1, 1, 1], [0], [0]>} : vector<2x8x64xbf16>, vector<2x8x64xbf16>, vector<2x8x8xf32> -> vector<2x8x8xf32>
    %c0_i8 = arith.constant 0 : i8
    %5 = vector.broadcast %c0_i8 : i8 to vector<2x8x8xi8>
    %6 = arith.cmpi ne, %3, %5 : vector<2x8x8xi8>
    %cst_11 = arith.constant -1.000000e+09 : f32
    %7 = vector.broadcast %cst_11 : f32 to vector<2x8x8xf32>
    %8 = arith.select %6, %7, %4 : vector<2x8x8xi1>, vector<2x8x8xf32>
    %cst_12 = arith.constant dense<0xFF800000> : vector<2x8xf32>
    %9 = vector.multi_reduction <maximumf>, %8, %cst_12 [2] : vector<2x8x8xf32> to vector<2x8xf32>
    %10 = vector.shape_cast %9 : vector<2x8xf32> to vector<2x8x1xf32>
    %11 = vector.broadcast %10 : vector<2x8x1xf32> to vector<2x8x8xf32>
    %12 = arith.subf %8, %11 : vector<2x8x8xf32>
    %13 = math.exp %12 : vector<2x8x8xf32>
    %cst_13 = arith.constant dense<0.000000e+00> : vector<2x8xf32>
    %14 = vector.multi_reduction <add>, %13, %cst_13 [2] : vector<2x8x8xf32> to vector<2x8xf32>
    %15 = vector.shape_cast %14 : vector<2x8xf32> to vector<2x8x1xf32>
    %16 = vector.broadcast %15 : vector<2x8x1xf32> to vector<2x8x8xf32>
    %17 = arith.divf %13, %16 : vector<2x8x8xf32>
    %c0_14 = arith.constant 0 : index
    %c0_15 = arith.constant 0 : index
    %c0_16 = arith.constant 0 : index
    %18 = vector.load %arg7[%c0_14, %c0_15, %c0_16] : memref<2x8x8xf32, #tpu.memory_space<vmem>>, vector<2x8x8xf32>
    tpu.vector_store %arg7[%c0_14, %c0_15, %c0_16], %17 {strides = array<i32>} : memref<2x8x8xf32, #tpu.memory_space<vmem>>, vector<2x8x8xf32>,
    %19 = arith.truncf %17 : vector<2x8x8xf32> to vector<2x8x8xbf16>
    %cst_17 = arith.constant dense<0.000000e+00> : vector<2x8x64xf32>
    %20 = tpu.matmul %19, %2, %cst_17 {dimension_numbers = #tpu.dot_dimension_numbers<[2], [1], [1], [2], [0, 0, 0, 1, 1, 2], [0], [0]>} : vector<2x8x8xbf16>, vector<2x8x64xbf16>, vector<2x8x64xf32> -> vector<2x8x64xf32>
    %c0_18 = arith.constant 0 : index
    %c0_19 = arith.constant 0 : index
    %c0_20 = arith.constant 0 : index
    %21 = vector.load %arg6[%c0_18, %c0_19, %c0_20] : memref<2x8x64xf32, #tpu.memory_space<vmem>>, vector<2x8x64xf32>
    tpu.vector_store %arg6[%c0_18, %c0_19, %c0_20], %20 {strides = array<i32>} : memref<2x8x64xf32, #tpu.memory_space<vmem>>, vector<2x8x64xf32>,
    return
  }
  func.func @transform_0(%arg0: i32, %arg1: i32) -> (i32, i32, i32) {
    %c0_i32 = arith.constant 0 : i32
    %c0_i32_0 = arith.constant 0 : i32
    return %arg0, %arg1, %c0_i32 : i32, i32, i32
  }
  func.func @transform_1(%arg0: i32, %arg1: i32) -> (i32, i32, i32) {
    %c0_i32 = arith.constant 0 : i32
    %c0_i32_0 = arith.constant 0 : i32
    %c0_i32_1 = arith.constant 0 : i32
    return %arg0, %c0_i32, %c0_i32_0 : i32, i32, i32
  }
  func.func @transform_2(%arg0: i32, %arg1: i32) -> (i32, i32, i32) {
    %c0_i32 = arith.constant 0 : i32
    %c0_i32_0 = arith.constant 0 : i32
    %c0_i32_1 = arith.constant 0 : i32
    return %arg0, %c0_i32, %c0_i32_0 : i32, i32, i32
  }
  func.func @transform_3(%arg0: i32, %arg1: i32) -> (i32, i32, i32) {
    %c0_i32 = arith.constant 0 : i32
    %c0_i32_0 = arith.constant 0 : i32
    return %arg0, %arg1, %c0_i32 : i32, i32, i32
  }
  func.func @transform_4(%arg0: i32, %arg1: i32) -> (i32, i32, i32) {
    %c0_i32 = arith.constant 0 : i32
    %c0_i32_0 = arith.constant 0 : i32
    return %arg0, %arg1, %c0_i32 : i32, i32, i32
  }
  func.func @transform_5(%arg0: i32, %arg1: i32) -> (i32, i32, i32) {
    %c0_i32 = arith.constant 0 : i32
    %c0_i32_0 = arith.constant 0 : i32
    return %arg0, %arg1, %c0_i32 : i32, i32, i32
  }
}

</mosaic_0001>

<llo_original>
// kernel: tpu_custom_call.1
$region0: #{tpu_custom_call.1}
  #allocation0 [shape = 'u32[]', space=smem, size = 0x4, offset = 0x4, fixed_abs, tag = 'smem constant byte address 0x4 - core index']
  #allocation1 [shape = 'u32[72,128]{1,0:T(1,128)}', space=vmem, size = 0x9000, scoped, tag = 'internal scratch']
  %s0 = inlined_call_operand.hbm [shape: bf16[4,8,64], index: 0, kind: input, shape index: {}]
  %s1 = inlined_call_operand.hbm [shape: bf16[4,8,64], index: 1, kind: input, shape index: {}]
  %s2 = inlined_call_operand.hbm [shape: bf16[4,8,64], index: 2, kind: input, shape index: {}]
  %s3 = inlined_call_operand.hbm [shape: s8[4,8,8], index: 3, kind: input, shape index: {}]
  %s4 = inlined_call_operand.hbm [shape: f32[4,8,64], index: 4, kind: output, shape index: {0}]
  %s5 = inlined_call_operand.hbm [shape: f32[4,8,8], index: 5, kind: output, shape index: {1}]
  %6 = xla_tuple %s4, %s5
  %s7 = sld [smem:[#allocation0]]
  $region73: #{tpu_custom_call.1} parent=0
    _
  %s9 = ssub.s32 1, %s7
  %s10 = scalar_select 0, %s9, %s7
  $region1: #{tpu_custom_call.1} parent=0
    #allocation2 [shape = 'u8[8192]{0}', space=vmem, size = 0x2000, scoped, tag = 'input window, operand 0']
    #allocation3 [shape = 's32[2]{0}', space=sflag, size = 0x8, scoped, tag = 'scoped memory for tpu_custom_call.1']
    #allocation4 [shape = 's32[2]{0}', space=sflag, size = 0x8, scoped, tag = 'scoped memory for tpu_custom_call.1']
    #allocation5 [shape = 'u8[8192]{0}', space=vmem, size = 0x2000, scoped, tag = 'input window, operand 1']
    #allocation6 [shape = 's32[2]{0}', space=sflag, size = 0x8, scoped, tag = 'scoped memory for tpu_custom_call.1']
    #allocation7 [shape = 'u8[8192]{0}', space=vmem, size = 0x2000, scoped, tag = 'input window, operand 2']
    #allocation8 [shape = 'u8[4096]{0}', space=vmem, size = 0x1000, scoped, tag = 'input window, operand 3']
    #allocation9 [shape = 's32[2]{0}', space=sflag, size = 0x8, scoped, tag = 'scoped memory for tpu_custom_call.1']
    #allocation10 [shape = 'u8[16384]{0}', space=vmem, size = 0x4000, scoped, tag = 'output window, operand 0']
    #allocation11 [shape = 'u8[16384]{0}', space=vmem, size = 0x4000, scoped, tag = 'output window, operand 1']
    #allocation12 [shape = 's32[2]{0}', space=sflag, size = 0x8, scoped, tag = 'scoped memory for tpu_custom_call.1']
    %11 = vsyncpa [#allocation3], 0
    %s12 = scalar_lea.sflag [#allocation3], 1
    %13 = vsyncpa %s12, 0
    %14 = vsyncpa [#allocation6], 0
    %s15 = scalar_lea.sflag [#allocation6], 1
    %16 = vsyncpa %s15, 0
    %17 = vsyncpa [#allocation9], 0
    %s18 = scalar_lea.sflag [#allocation9], 1
    %19 = vsyncpa %s18, 0
    %20 = vsyncpa [#allocation4], 0
    %s21 = scalar_lea.sflag [#allocation4], 1
    %22 = vsyncpa %s21, 0
    %23 = vsyncpa [#allocation12], 0
    %s24 = scalar_lea.sflag [#allocation12], 1
    %25 = vsyncpa %s24, 0
    loop: start=0, step=1, limit=4
    $region2: #{tpu_custom_call.1} parent=1 // loop_pre_header
      _
    $region3: #{tpu_custom_call.1} parent=1 // loop_header
      %s27 = sphi 0, %s31
      %p28 = scmp.ge.s32.totalorder %s27, 4
      %s34 = sphi 0, %s46
      %s35 = sphi 0, %s42
      %s36 = sphi 0, %s34
      %s37 = sphi 0, %s35
      %s38 = sphi 0, %s36
      %s39 = sphi 0, %s37
      %s51 = sphi 0, %s53
      %s54 = sphi 0, %s51
      %s55 = sphi 0, %s54
      %s71 = sphi 0, %s55
      %s77 = sphi 0, %s79
      %s80 = sphi 0, %s77
      %s81 = sphi 0, %s80
      %s97 = sphi 0, %s81
      %s103 = sphi 0, %s105
      %s106 = sphi 0, %s103
      %s107 = sphi 0, %s106
      %s123 = sphi 0, %s107
      %s131 = sphi 0, %s133
      %s134 = sphi 0, %s131
      %s135 = sphi 0, %s134
      %s151 = sphi 0, %s135
      %s159 = sphi 0, %s161
      %s162 = sphi 0, %s159
      %s163 = sphi 0, %s162
      %s179 = sphi 0, %s163
      %s187 = sphi 0, %s189
      %s190 = sphi 0, %s187
      %s191 = sphi 0, %s190
      %s207 = sphi 0, %s191
    $region4: #{tpu_custom_call.1} parent=1 // loop_header_branch
      %30 = sbr.rel (%p28) target = $region8
    $region5: #{tpu_custom_call.1} parent=1 // loop_body
      %s32 = ssub.s32 %s27, 1
      %s33 = ssub.s32 %s27, 2
      %s40 = sadd.s32 1, %s35
      %p41 = scmp.ge.s32.totalorder %s40, 1
      %s42 = scalar_select %p41, 0, %s40
      %s43 = sadd.s32 1, %s34
      %s44 = scalar_select %p41, %s43, %s34
      %p45 = scmp.ge.s32.totalorder %s44, 2
      %s46 = scalar_select %p45, 0, %s44
      %s47 = ssub.s32 %s34, %s46
      %s48 = ssub.s32 %s35, %s42
      %s49 = sor.u32 %s47, %s48
      %p50 = scmp.eq.s32.totalorder %s49, 0
      %s52 = sadd.s32 %s51, 1
      %s53 = scalar_select %p50, %s51, %s52
      %p56 = pneg %p50
      %p57 = scmp.eq.s32.totalorder %s27, 1
      %p58 = por %p56, %p57
      %p59 = scmp.ne.s32.totalorder %s51, %s54
      %p60 = scmp.eq.s32.totalorder %s27, 0
      %p61 = por %p59, %p60
      %p62 = scmp.ne.s32.totalorder %s51, %s54
      %p63 = scmp.eq.s32.totalorder %s32, 1
      %p64 = por %p62, %p63
      %p65 = scmp.ne.s32.totalorder %s54, %s55
      %p66 = scmp.eq.s32.totalorder %s32, 0
      %p67 = por %p65, %p66
      %p68 = scmp.ne.s32.totalorder %s54, %s55
      %p69 = scmp.eq.s32.totalorder %s33, 1
      %p70 = por %p68, %p69
      %p72 = scmp.ne.s32.totalorder %s55, %s71
      %p73 = scmp.eq.s32.totalorder %s33, 0
      %p74 = por %p72, %p73
      %s75 = ssub.s32 %s34, %s46
      %p76 = scmp.eq.s32.totalorder %s75, 0
      %s78 = sadd.s32 %s77, 1
      %s79 = scalar_select %p76, %s77, %s78
      %p82 = pneg %p76
      %p83 = scmp.eq.s32.totalorder %s27, 1
      %p84 = por %p82, %p83
      %p85 = scmp.ne.s32.totalorder %s77, %s80
      %p86 = scmp.eq.s32.totalorder %s27, 0
      %p87 = por %p85, %p86
      %p88 = scmp.ne.s32.totalorder %s77, %s80
      %p89 = scmp.eq.s32.totalorder %s32, 1
      %p90 = por %p88, %p89
      %p91 = scmp.ne.s32.totalorder %s80, %s81
      %p92 = scmp.eq.s32.totalorder %s32, 0
      %p93 = por %p91, %p92
      %p94 = scmp.ne.s32.totalorder %s80, %s81
      %p95 = scmp.eq.s32.totalorder %s33, 1
      %p96 = por %p94, %p95
      %p98 = scmp.ne.s32.totalorder %s81, %s97
      %p99 = scmp.eq.s32.totalorder %s33, 0
      %p100 = por %p98, %p99
      %s101 = ssub.s32 %s34, %s46
      %p102 = scmp.eq.s32.totalorder %s101, 0
      %s104 = sadd.s32 %s103, 1
      %s105 = scalar_select %p102, %s103, %s104
      %p108 = pneg %p102
      %p109 = scmp.eq.s32.totalorder %s27, 1
      %p110 = por %p108, %p109
      %p111 = scmp.ne.s32.totalorder %s103, %s106
      %p112 = scmp.eq.s32.totalorder %s27, 0
      %p113 = por %p111, %p112
      %p114 = scmp.ne.s32.totalorder %s103, %s106
      %p115 = scmp.eq.s32.totalorder %s32, 1
      %p116 = por %p114, %p115
      %p117 = scmp.ne.s32.totalorder %s106, %s107
      %p118 = scmp.eq.s32.totalorder %s32, 0
      %p119 = por %p117, %p118
      %p120 = scmp.ne.s32.totalorder %s106, %s107
      %p121 = scmp.eq.s32.totalorder %s33, 1
      %p122 = por %p120, %p121
      %p124 = scmp.ne.s32.totalorder %s107, %s123
      %p125 = scmp.eq.s32.totalorder %s33, 0
      %p126 = por %p124, %p125
      %s127 = ssub.s32 %s34, %s46
      %s128 = ssub.s32 %s35, %s42
      %s129 = sor.u32 %s127, %s128
      %p130 = scmp.eq.s32.totalorder %s129, 0
      %s132 = sadd.s32 %s131, 1
      %s133 = scalar_select %p130, %s131, %s132
      %p136 = pneg %p130
      %p137 = scmp.eq.s32.totalorder %s27, 1
      %p138 = por %p136, %p137
      %p139 = scmp.ne.s32.totalorder %s131, %s134
      %p140 = scmp.eq.s32.totalorder %s27, 0
      %p141 = por %p139, %p140
      %p142 = scmp.ne.s32.totalorder %s131, %s134
      %p143 = scmp.eq.s32.totalorder %s32, 1
      %p144 = por %p142, %p143
      %p145 = scmp.ne.s32.totalorder %s134, %s135
      %p146 = scmp.eq.s32.totalorder %s32, 0
      %p147 = por %p145, %p146
      %p148 = scmp.ne.s32.totalorder %s134, %s135
      %p149 = scmp.eq.s32.totalorder %s33, 1
      %p150 = por %p148, %p149
      %p152 = scmp.ne.s32.totalorder %s135, %s151
      %p153 = scmp.eq.s32.totalorder %s33, 0
      %p154 = por %p152, %p153
      %s155 = ssub.s32 %s34, %s46
      %s156 = ssub.s32 %s35, %s42
      %s157 = sor.u32 %s155, %s156
      %p158 = scmp.eq.s32.totalorder %s157, 0
      %s160 = sadd.s32 %s159, 1
      %s161 = scalar_select %p158, %s159, %s160
      %p164 = pneg %p158
      %p165 = scmp.eq.s32.totalorder %s27, 1
      %p166 = por %p164, %p165
      %p167 = scmp.ne.s32.totalorder %s159, %s162
      %p168 = scmp.eq.s32.totalorder %s27, 0
      %p169 = por %p167, %p168
      %p170 = scmp.ne.s32.totalorder %s159, %s162
      %p171 = scmp.eq.s32.totalorder %s32, 1
      %p172 = por %p170, %p171
      %p173 = scmp.ne.s32.totalorder %s162, %s163
      %p174 = scmp.eq.s32.totalorder %s32, 0
      %p175 = por %p173, %p174
      %p176 = scmp.ne.s32.totalorder %s162, %s163
      %p177 = scmp.eq.s32.totalorder %s33, 1
      %p178 = por %p176, %p177
      %p180 = scmp.ne.s32.totalorder %s163, %s179
      %p181 = scmp.eq.s32.totalorder %s33, 0
      %p182 = por %p180, %p181
      %s183 = ssub.s32 %s34, %s46
      %s184 = ssub.s32 %s35, %s42
      %s185 = sor.u32 %s183, %s184
      %p186 = scmp.eq.s32.totalorder %s185, 0
      %s188 = sadd.s32 %s187, 1
      %s189 = scalar_select %p186, %s187, %s188
      %p192 = pneg %p186
      %p193 = scmp.eq.s32.totalorder %s27, 1
      %p194 = por %p192, %p193
      %p195 = scmp.ne.s32.totalorder %s187, %s190
      %p196 = scmp.eq.s32.totalorder %s27, 0
      %p197 = por %p195, %p196
      %p198 = scmp.ne.s32.totalorder %s187, %s190
      %p199 = scmp.eq.s32.totalorder %s32, 1
      %p200 = por %p198, %p199
      %p201 = scmp.ne.s32.totalorder %s190, %s191
      %p202 = scmp.eq.s32.totalorder %s32, 0
      %p203 = por %p201, %p202
      %p204 = scmp.ne.s32.totalorder %s190, %s191
      %p205 = scmp.eq.s32.totalorder %s33, 1
      %p206 = por %p204, %p205
      %p208 = scmp.ne.s32.totalorder %s191, %s207
      %p209 = scmp.eq.s32.totalorder %s33, 0
      %p210 = por %p208, %p209
      %p211 = scmp.le.s32.totalorder 1, %s27
      %p212 = scmp.lt.s32.totalorder %s27, 3
      %p213 = pnand %p211, %p212
      %p214 = pneg %p213
      // Predicated region
      $region9: #{tpu_custom_call.1} parent=5 // pred_check
        _
      $region10: #{tpu_custom_call.1} parent=5 // pred_check_branch
        %216 = sbr.rel (%p213) target = $region12
      $region11: #{tpu_custom_call.1} parent=5 // pred_region
        %s217 = ssub.s32 %s27, 1
      $region12: #{tpu_custom_call.1} parent=5 // pred_fallthru
        _
      %p218 = scmp.lt.s32.totalorder %s27, 2
      // Predicated region
      $region13: #{tpu_custom_call.1} parent=5 // pred_check
        %p219 = pneg %p218
      $region14: #{tpu_custom_call.1} parent=5 // pred_check_branch
        %221 = sbr.rel (%p219) target = $region16
      $region15: #{tpu_custom_call.1} parent=5 // pred_region
        // Predicated region
        $region17: #{tpu_custom_call.1} parent=15 // pred_check
          %p222 = pneg %p61
        $region18: #{tpu_custom_call.1} parent=15 // pred_check_branch
          %224 = sbr.rel (%p222) target = $region20
        $region19: #{tpu_custom_call.1} parent=15 // pred_region
          %s225 = sand.u32 %s51, 1
          %s226 = scalar_lea.sflag [#allocation3], %s225
          %s227 = sand.u32 %s51, 1
          %s228 = smul.addr %s227, 8
          %s229 = scalar_lea.vmem [#allocation2], %s228
          %s230 = smul.u32 2, %s34
          %232 = vsyncadd %s226, 0
          %s233 = sadd.s32 %s35, %s230
          %s234 = smul.addr %s233, 4
          %s235 = scalar_lea.hbm %s0, %s234
          %s236 = sshll.u32 %s235, 4
          %s237 = int_to_ptr.hbm [resolvable:$true] %s236
          %s238 = sshll.u32 %s229, 4
          %s239 = int_to_ptr.vmem [resolvable:$true] %s238
          %244 = dma.hbm_to_vmem [thread:$0]  %s237, 128, %s239, %s226, 64, 64, 4
        $region20: #{tpu_custom_call.1} parent=15 // pred_fallthru
          _
        // Predicated region
        $region21: #{tpu_custom_call.1} parent=15 // pred_check
          %p245 = pneg %p87
        $region22: #{tpu_custom_call.1} parent=15 // pred_check_branch
          %247 = sbr.rel (%p245) target = $region24
        $region23: #{tpu_custom_call.1} parent=15 // pred_region
          %s248 = sand.u32 %s27, 1
          %s249 = scalar_lea.sflag [#allocation6], %s248
          %s250 = sand.u32 %s77, 1
          %s251 = smul.addr %s250, 8
          %s252 = scalar_lea.vmem [#allocation5], %s251
          %s253 = smul.u32 2, %s34
          %255 = vsyncadd %s249, 0
          %s256 = smul.addr %s253, 4
          %s257 = scalar_lea.hbm %s1, %s256
          %s258 = sshll.u32 %s257, 4
          %s259 = int_to_ptr.hbm [resolvable:$true] %s258
          %s260 = sshll.u32 %s252, 4
          %s261 = int_to_ptr.vmem [resolvable:$true] %s260
          %266 = dma.hbm_to_vmem [thread:$0]  %s259, 128, %s261, %s249, 64, 64, 4
        $region24: #{tpu_custom_call.1} parent=15 // pred_fallthru
          _
        // Predicated region
        $region25: #{tpu_custom_call.1} parent=15 // pred_check
          %p267 = pneg %p113
        $region26: #{tpu_custom_call.1} parent=15 // pred_check_branch
          %269 = sbr.rel (%p267) target = $region28
        $region27: #{tpu_custom_call.1} parent=15 // pred_region
          %s270 = sand.u32 %s27, 1
          %s271 = scalar_lea.sflag [#allocation6], %s270
          %s272 = sand.u32 %s103, 1
          %s273 = smul.addr %s272, 8
          %s274 = scalar_lea.vmem [#allocation7], %s273
          %s275 = smul.u32 2, %s34
          %277 = vsyncadd %s271, 0
          %s278 = smul.addr %s275, 4
          %s279 = scalar_lea.hbm %s2, %s278
          %s280 = sshll.u32 %s279, 4
          %s281 = int_to_ptr.hbm [resolvable:$true] %s280
          %s282 = sshll.u32 %s274, 4
          %s283 = int_to_ptr.vmem [resolvable:$true] %s282
          %288 = dma.hbm_to_vmem [thread:$0]  %s281, 128, %s283, %s271, 64, 64, 4
        $region28: #{tpu_custom_call.1} parent=15 // pred_fallthru
          _
        // Predicated region
        $region29: #{tpu_custom_call.1} parent=15 // pred_check
          %p289 = pneg %p141
        $region30: #{tpu_custom_call.1} parent=15 // pred_check_branch
          %291 = sbr.rel (%p289) target = $region32
        $region31: #{tpu_custom_call.1} parent=15 // pred_region
          %s292 = sand.u32 %s131, 1
          %s293 = scalar_lea.sflag [#allocation9], %s292
          %s294 = sand.u32 %s131, 1
          %s295 = smul.addr %s294, 4
          %s296 = scalar_lea.vmem [#allocation8], %s295
          %s297 = smul.u32 2, %s34
          %299 = vsyncadd %s293, 0
          %s300 = sadd.s32 %s35, %s297
          %s301 = smul.addr %s300, 2
          %s302 = scalar_lea.hbm %s3, %s301
          %s303 = sshll.u32 %s302, 4
          %s304 = int_to_ptr.hbm [resolvable:$true] %s303
          %s305 = sshll.u32 %s296, 4
          %s306 = int_to_ptr.vmem [resolvable:$true] %s305
          %311 = dma.hbm_to_vmem [thread:$0]  %s304, 64, %s306, %s293, 32, 32, 2
        $region32: #{tpu_custom_call.1} parent=15 // pred_fallthru
          _
      $region16: #{tpu_custom_call.1} parent=5 // pred_fallthru
        _
      %p312 = scmp.le.s32.totalorder 1, %s27
      %p313 = scmp.lt.s32.totalorder %s27, 3
      %p314 = pnand %p312, %p313
      %p315 = pneg %p314
      // Predicated region
      $region33: #{tpu_custom_call.1} parent=5 // pred_check
        _
      $region34: #{tpu_custom_call.1} parent=5 // pred_check_branch
        %317 = sbr.rel (%p314) target = $region36
      $region35: #{tpu_custom_call.1} parent=5 // pred_region
        %s318 = ssub.s32 %s27, 1
        %s319 = sand.u32 %s54, 1
        %s320 = scalar_lea.sflag [#allocation3], %s319
        %s321 = sand.u32 %s54, 1
        %s322 = smul.addr %s321, 8
        %s323 = scalar_lea.vmem [#allocation2], %s322
        // Predicated region
        $region37: #{tpu_custom_call.1} parent=35 // pred_check
          %p324 = pneg %p67
        $region38: #{tpu_custom_call.1} parent=35 // pred_check_branch
          %326 = sbr.rel (%p324) target = $region40
        $region39: #{tpu_custom_call.1} parent=35 // pred_region
          %328 = dma.done %s320, 128
        $region40: #{tpu_custom_call.1} parent=35 // pred_fallthru
          _
        %s329 = sand.u32 %s32, 1
        %s330 = scalar_lea.sflag [#allocation6], %s329
        %s331 = sand.u32 %s80, 1
        %s332 = smul.addr %s331, 8
        %s333 = scalar_lea.vmem [#allocation5], %s332
        // Predicated region
        $region41: #{tpu_custom_call.1} parent=35 // pred_check
          %p334 = pneg %p93
        $region42: #{tpu_custom_call.1} parent=35 // pred_check_branch
          %336 = sbr.rel (%p334) target = $region44
        $region43: #{tpu_custom_call.1} parent=35 // pred_region
          %338 = dma.done %s330, 128
        $region44: #{tpu_custom_call.1} parent=35 // pred_fallthru
          _
        %s339 = sand.u32 %s32, 1
        %s340 = scalar_lea.sflag [#allocation6], %s339
        %s341 = sand.u32 %s106, 1
        %s342 = smul.addr %s341, 8
        %s343 = scalar_lea.vmem [#allocation7], %s342
        // Predicated region
        $region45: #{tpu_custom_call.1} parent=35 // pred_check
          %p344 = pneg %p119
        $region46: #{tpu_custom_call.1} parent=35 // pred_check_branch
          %346 = sbr.rel (%p344) target = $region48
        $region47: #{tpu_custom_call.1} parent=35 // pred_region
          %348 = dma.done %s340, 128
        $region48: #{tpu_custom_call.1} parent=35 // pred_fallthru
          _
        %s349 = sand.u32 %s134, 1
        %s350 = scalar_lea.sflag [#allocation9], %s349
        %s351 = sand.u32 %s134, 1
        %s352 = smul.addr %s351, 4
        %s353 = scalar_lea.vmem [#allocation8], %s352
        // Predicated region
        $region49: #{tpu_custom_call.1} parent=35 // pred_check
          %p354 = pneg %p147
        $region50: #{tpu_custom_call.1} parent=35 // pred_check_branch
          %356 = sbr.rel (%p354) target = $region52
        $region51: #{tpu_custom_call.1} parent=35 // pred_region
          %358 = dma.done %s350, 64
        $region52: #{tpu_custom_call.1} parent=35 // pred_fallthru
          _
        %s359 = sand.u32 %s54, 1
        %s360 = scalar_lea.sflag [#allocation3], %s359
        %s361 = sand.u32 %s54, 1
        %s362 = smul.addr %s361, 8
        %s363 = scalar_lea.vmem [#allocation2], %s362
        %p364 = pneg %p67
        %p365 = pneg %p64
        %s366 = sand.u32 %s32, 1
        %s367 = scalar_lea.sflag [#allocation6], %s366
        %s368 = sand.u32 %s80, 1
        %s369 = smul.addr %s368, 8
        %s370 = scalar_lea.vmem [#allocation5], %s369
        %p371 = pneg %p93
        %p372 = pneg %p90
        %s373 = sand.u32 %s32, 1
        %s374 = scalar_lea.sflag [#allocation6], %s373
        %s375 = sand.u32 %s106, 1
        %s376 = smul.addr %s375, 8
        %s377 = scalar_lea.vmem [#allocation7], %s376
        %p378 = pneg %p119
        %p379 = pneg %p116
        %s380 = sand.u32 %s134, 1
        %s381 = scalar_lea.sflag [#allocation9], %s380
        %s382 = sand.u32 %s134, 1
        %s383 = smul.addr %s382, 4
        %s384 = scalar_lea.vmem [#allocation8], %s383
        %p385 = pneg %p147
        %p386 = pneg %p144
        %p387 = pneg %p175
        %p388 = pneg %p172
        %s389 = sand.u32 %s162, 1
        %s390 = scalar_lea.sflag [#allocation4], %s389
        %s391 = sand.u32 %s162, 1
        %s392 = smul.addr %s391, 16
        %s393 = scalar_lea.vmem [#allocation10], %s392
        %p394 = pneg %p203
        %p395 = pneg %p200
        %s396 = sand.u32 %s190, 1
        %s397 = scalar_lea.sflag [#allocation12], %s396
        %s398 = sand.u32 %s190, 1
        %s399 = smul.addr %s398, 16
        %s400 = scalar_lea.vmem [#allocation11], %s399
        %s401 = smul.u32 2, %s36
        %s402 = smul.u32 2, %s36
        %s403 = smul.u32 2, %s36
        %s404 = smul.u32 2, %s36
        %s405 = smul.u32 2, %s36
        %s406 = smul.u32 2, %s36
        %v410 = vld [vmem:[%s323] sm:$0xf]
        %v411 = vld [vmem:[%s323 + $0x4] sm:$0xf]
        %v412 = vld [vmem:[%s333] sm:$0xf]
        %v413 = vld [vmem:[%s333 + $0x4] sm:$0xf]
        %v414 = vld [vmem:[%s343] sm:$0xf]
        %v415 = vld [vmem:[%s343 + $0x4] sm:$0xf]
        %v416 = vld [vmem:[%s353] sm:$0x3]
        %v417 = vld [vmem:[%s353 + $0x2] sm:$0x3]
        %vm418 = vcmask 523264
        %v420 = vsel %vm418, %v410, 0
        %v423 = vsel %vm418, %v412, 0
        %425 = vmatpush.bf16.xpose.msra.mxu0 0
        %426 = vmatpush.bf16.xpose.msra.mxu0 0
        %427 = vmatpush.bf16.xpose.msra.mxu0 0
        %428 = vmatpush.bf16.xpose.msra.mxu0 0
        %429 = vmatpush.bf16.xpose.msra.mxu0 0
        %430 = vmatpush.bf16.xpose.msra.mxu0 0
        %431 = vmatpush.bf16.xpose.msra.mxu0 0
        %432 = vmatpush.bf16.xpose.msra.mxu0 %v423
        %433 = vmatmul.bf16.gmra.mxu0 %v420
        %v434 = vpop.f32.mrf.mxu0
        %v435 = vadd.f32 0.0, %v434
        %v436 = vpop.f32.mrf.mxu0
        %437 = vdwg.mxu0
        %v439 = vsel %vm418, %v411, 0
        %v442 = vsel %vm418, %v413, 0
        %444 = vmatpush.bf16.xpose.msra.mxu0 0
        %445 = vmatpush.bf16.xpose.msra.mxu0 0
        %446 = vmatpush.bf16.xpose.msra.mxu0 0
        %447 = vmatpush.bf16.xpose.msra.mxu0 0
        %448 = vmatpush.bf16.xpose.msra.mxu0 0
        %449 = vmatpush.bf16.xpose.msra.mxu0 0
        %450 = vmatpush.bf16.xpose.msra.mxu0 0
        %451 = vmatpush.bf16.xpose.msra.mxu0 %v442
        %452 = vmatmul.bf16.gmra.mxu0 %v439
        %v453 = vpop.f32.mrf.mxu0
        %v454 = vadd.f32 0.0, %v453
        %v455 = vpop.f32.mrf.mxu0
        %456 = vdwg.mxu0
        %vm457 = vnez %v416
        %vm458 = vnez %v417
        %v459 = vsel %vm457, 16843009, 0
        %v460 = vsel %vm458, 16843009, 0
        %v461 = vunpack.c.0.s8 %v459
        %v462 = vunpack.c.0.s8 %v460
        %vm463 = vcmp.ne.s32.totalorder %v461, 0
        %vm464 = vcmp.ne.s32.totalorder %v462, 0
        %v465 = vsel %vm463, -1e+09, %v435
        %v466 = vsel %vm464, -1e+09, %v454
        %vm467 = vcmask 64512
        %v468 = vsel %vm467, %v465, -inf
        %469 = vmax.xlane.f32.xlu0 %v468
        %v470 = vpop.xlane.xlu0 %469
        %v471 = vsel %vm467, %v466, -inf
        %472 = vmax.xlane.f32.xlu0 %v471
        %v473 = vpop.xlane.xlu0 %472
        %v474 = vsub.f32 %v465, %v470
        %v475 = vsub.f32 %v466, %v473
        %v476 = vmul.f32 %v474, 1.442695
        %v477 = vpow.pop %v476
        %v478 = vmul.f32 %v475, 1.442695
        %v479 = vpow.pop %v478
        %v480 = vsel %vm467, %v477, 0.0
        %481 = vadd.xlane.f32.xlu0 %v480
        %v482 = vpop.xlane.xlu0 %481
        %v483 = vsel %vm467, %v479, 0.0
        %484 = vadd.xlane.f32.xlu0 %v483
        %v485 = vpop.xlane.xlu0 %484
        %v486 = vrcp.pop %v482
        %v487 = vmul.f32 %v482, %v486
        %v488 = vsub.f32 1.0, %v487
        %v489 = vmul.f32 %v486, %v488
        %v490 = vadd.f32 %v486, %v489
        %vm491 = vweird.f32 %v482
        %vm492 = vweird.f32 %v486
        %vm493 = vmor %vm491, %vm492
        %v494 = vsel %vm493, %v486, %v490
        %v495 = vand.u32 2147483647, %v482
        %vm496 = vcmp.eq.f32.partialorder %v495, 8.507059e+37
        %v497 = vand.u32 %v482, 2147483648
        %v498 = vor.u32 1.1754944e-38, %v497
        %v499 = vsel %vm496, %v498, %v494
        %v500 = vmul.f32 %v477, %v499
        %v501 = vrcp.pop %v485
        %v502 = vmul.f32 %v485, %v501
        %v503 = vsub.f32 1.0, %v502
        %v504 = vmul.f32 %v501, %v503
        %v505 = vadd.f32 %v501, %v504
        %vm506 = vweird.f32 %v485
        %vm507 = vweird.f32 %v501
        %vm508 = vmor %vm506, %vm507
        %v509 = vsel %vm508, %v501, %v505
        %v510 = vand.u32 2147483647, %v485
        %vm511 = vcmp.eq.f32.partialorder %v510, 8.507059e+37
        %v512 = vand.u32 %v485, 2147483648
        %v513 = vor.u32 1.1754944e-38, %v512
        %v514 = vsel %vm511, %v513, %v509
        %v515 = vmul.f32 %v479, %v514
        %516 = vst.msk [vmem:[%s400] sm:$0xff] %vm467, %v500
        %517 = vst.msk [vmem:[%s400 + $0x8] sm:$0xff] %vm467, %v515
        %v518 = vpack.c.bf16 %v500, %v500
        %v519 = vpack.c.bf16 %v515, %v515
        %v521 = vsel %vm467, %v518, 0
        %vm523 = vcmask 1043456
        %v525 = vsel %vm523, %v414, 0
        %527 = vmatpush.bf16.msra.mxu0 0
        %528 = vmatpush.bf16.msra.mxu0 0
        %529 = vmatpush.bf16.msra.mxu0 0
        %530 = vmatpush.bf16.msra.mxu0 0
        %531 = vmatpush.bf16.msra.mxu0 0
        %532 = vmatpush.bf16.msra.mxu0 0
        %533 = vmatpush.bf16.msra.mxu0 0
        %534 = vmatpush.bf16.msra.mxu0 %v525
        %535 = vmatmul.bf16.gmra.mxu0 %v521
        %v536 = vpop.f32.mrf.mxu0
        %v537 = vadd.f32 0.0, %v536
        %v538 = vpop.f32.mrf.mxu0
        %539 = vdwg.mxu0
        %v541 = vsel %vm467, %v519, 0
        %v544 = vsel %vm523, %v415, 0
        %546 = vmatpush.bf16.msra.mxu0 0
        %547 = vmatpush.bf16.msra.mxu0 0
        %548 = vmatpush.bf16.msra.mxu0 0
        %549 = vmatpush.bf16.msra.mxu0 0
        %550 = vmatpush.bf16.msra.mxu0 0
        %551 = vmatpush.bf16.msra.mxu0 0
        %552 = vmatpush.bf16.msra.mxu0 0
        %553 = vmatpush.bf16.msra.mxu0 %v544
        %554 = vmatmul.bf16.gmra.mxu0 %v541
        %v555 = vpop.f32.mrf.mxu0
        %v556 = vadd.f32 0.0, %v555
        %v557 = vpop.f32.mrf.mxu0
        %558 = vdwg.mxu0
        %559 = vst.msk [vmem:[%s393] sm:$0xff] %vm418, %v537
        %560 = vst.msk [vmem:[%s393 + $0x8] sm:$0xff] %vm418, %v556
        %s561 = sand.u32 %s162, 1
        %s562 = scalar_lea.sflag [#allocation4], %s561
        %s563 = sand.u32 %s162, 1
        %s564 = smul.addr %s563, 16
        %s565 = scalar_lea.vmem [#allocation10], %s564
        %s566 = sand.u32 %s190, 1
        %s567 = scalar_lea.sflag [#allocation12], %s566
        %s568 = sand.u32 %s190, 1
        %s569 = smul.addr %s568, 16
        %s570 = scalar_lea.vmem [#allocation11], %s569
        // Predicated region
        $region53: #{tpu_custom_call.1} parent=35 // pred_check
          %p571 = pneg %p172
        $region54: #{tpu_custom_call.1} parent=35 // pred_check_branch
          %573 = sbr.rel (%p571) target = $region56
        $region55: #{tpu_custom_call.1} parent=35 // pred_region
          %s574 = smul.u32 2, %s36
          %576 = vsyncadd %s562, 0
          %s577 = sadd.s32 %s37, %s574
          %s578 = smul.addr %s577, 8
          %s579 = scalar_lea.hbm %s4, %s578
          %s580 = sshll.u32 %s565, 4
          %s581 = int_to_ptr.vmem [resolvable:$true] %s580
          %s582 = sshll.u32 %s579, 4
          %s583 = int_to_ptr.hbm [resolvable:$true] %s582
          %588 = dma.vmem_to_hbm [thread:$0]  %s581, 256, %s583, %s562, 128, 128, 8
        $region56: #{tpu_custom_call.1} parent=35 // pred_fallthru
          _
        // Predicated region
        $region57: #{tpu_custom_call.1} parent=35 // pred_check
          %p589 = pneg %p200
        $region58: #{tpu_custom_call.1} parent=35 // pred_check_branch
          %591 = sbr.rel (%p589) target = $region60
        $region59: #{tpu_custom_call.1} parent=35 // pred_region
          %s592 = smul.u32 2, %s36
          %594 = vsyncadd %s567, 0
          %s595 = sadd.s32 %s37, %s592
          %s596 = smul.addr %s595, 8
          %s597 = scalar_lea.hbm %s5, %s596
          %s598 = sshll.u32 %s570, 4
          %s599 = int_to_ptr.vmem [resolvable:$true] %s598
          %s600 = sshll.u32 %s597, 4
          %s601 = int_to_ptr.hbm [resolvable:$true] %s600
          %606 = dma.vmem_to_hbm [thread:$0]  %s599, 256, %s601, %s567, 128, 128, 8
        $region60: #{tpu_custom_call.1} parent=35 // pred_fallthru
          _
      $region36: #{tpu_custom_call.1} parent=5 // pred_fallthru
        _
      %p607 = scmp.le.s32.totalorder 2, %s27
      // Predicated region
      $region61: #{tpu_custom_call.1} parent=5 // pred_check
        %p608 = pneg %p607
      $region62: #{tpu_custom_call.1} parent=5 // pred_check_branch
        %610 = sbr.rel (%p608) target = $region64
      $region63: #{tpu_custom_call.1} parent=5 // pred_region
        %s611 = ssub.s32 %s27, 2
        // Predicated region
        $region65: #{tpu_custom_call.1} parent=63 // pred_check
          %p612 = pneg %p178
        $region66: #{tpu_custom_call.1} parent=63 // pred_check_branch
          %614 = sbr.rel (%p612) target = $region68
        $region67: #{tpu_custom_call.1} parent=63 // pred_region
          %s615 = sand.u32 %s163, 1
          %s616 = scalar_lea.sflag [#allocation4], %s615
          %s617 = sand.u32 %s163, 1
          %s618 = smul.addr %s617, 16
          %s619 = scalar_lea.vmem [#allocation10], %s618
          %621 = dma.done %s616, 256
        $region68: #{tpu_custom_call.1} parent=63 // pred_fallthru
          _
        // Predicated region
        $region69: #{tpu_custom_call.1} parent=63 // pred_check
          %p622 = pneg %p206
        $region70: #{tpu_custom_call.1} parent=63 // pred_check_branch
          %624 = sbr.rel (%p622) target = $region72
        $region71: #{tpu_custom_call.1} parent=63 // pred_region
          %s625 = sand.u32 %s191, 1
          %s626 = scalar_lea.sflag [#allocation12], %s625
          %s627 = sand.u32 %s191, 1
          %s628 = smul.addr %s627, 16
          %s629 = scalar_lea.vmem [#allocation11], %s628
          %631 = dma.done %s626, 256
        $region72: #{tpu_custom_call.1} parent=63 // pred_fallthru
          _
      $region64: #{tpu_custom_call.1} parent=5 // pred_fallthru
        _
    $region6: #{tpu_custom_call.1} parent=1 // loop_footer
      %s31 = sadd.s32 1, %s27
    $region7: #{tpu_custom_call.1} parent=1 // loop_footer_branch
      %26 = sbr.rel target = $region3
    $region8: #{tpu_custom_call.1} parent=1 // loop_exit
      _
    %632 = vsyncpa [#allocation3], 1
    %s633 = scalar_lea.sflag [#allocation3], 1
    %634 = vsyncpa %s633, 1
    %635 = vsyncpa [#allocation6], 1
    %s636 = scalar_lea.sflag [#allocation6], 1
    %637 = vsyncpa %s636, 1
    %638 = vsyncpa [#allocation9], 1
    %s639 = scalar_lea.sflag [#allocation9], 1
    %640 = vsyncpa %s639, 1
    %641 = vsyncpa [#allocation4], 1
    %s642 = scalar_lea.sflag [#allocation4], 1
    %643 = vsyncpa %s642, 1
    %644 = vsyncpa [#allocation12], 1
    %s645 = scalar_lea.sflag [#allocation12], 1
    %646 = vsyncpa %s645, 1

</llo_original>
